<compile_context>
chip_gen: v6e
topology: v6e:2x2x1
jax: 0.10.0
libtpu: 0.0.40
codegen_flags: <defaults>
</compile_context>

<pallas_src>
import math

import jax
import jax.numpy as jnp
from jax.experimental import pallas as pl
from jax.experimental.pallas import tpu as pltpu

LANE = 128        # lane width (last-dim padding target)
SUBLANE = 16      # bf16 sublane packing (batch-tile granularity)
_NEG_BIG = -1e30  # mask value for padded action lanes (folded into b3)


def _round_up(n, m):
    return ((n + m - 1) // m) * m


# --------------------------------------------------------------------------- #
# Kernel body
# --------------------------------------------------------------------------- #
def actor_kernel(x_ref, w1_ref, b1_ref, w2_ref, b2_ref, w3_ref, b3_ref, out_ref):
    x = x_ref[...]                                                 # (TB, S_pad) bf16

    # fc1 + relu  (MXU bf16 operands, f32 accumulate; elementwise in f32)
    h1 = jnp.dot(x, w1_ref[...], preferred_element_type=jnp.float32) + b1_ref[...]
    h1 = jnp.maximum(h1, 0.0)

    # fc2 + relu
    h2 = jnp.dot(h1.astype(jnp.bfloat16), w2_ref[...],
                 preferred_element_type=jnp.float32) + b2_ref[...]
    h2 = jnp.maximum(h2, 0.0)

    # fc3: padded w3 columns are zero and padded b3 lanes are -1e30, so the
    # padded logits are already masked — no iota/where needed here.
    logits = jnp.dot(h2.astype(jnp.bfloat16), w3_ref[...],
                     preferred_element_type=jnp.float32) + b3_ref[...]

    # Numerically-stable log_softmax over the feature dim (masked lanes -> exp 0).
    m = jnp.max(logits, axis=-1, keepdims=True)
    shifted = logits - m
    lse = jnp.log(jnp.sum(jnp.exp(shifted), axis=-1, keepdims=True))
    out_ref[...] = shifted - lse


# --------------------------------------------------------------------------- #
# Parameter padding (done once, amortized across calls)
# --------------------------------------------------------------------------- #
def pad_params(params):
    """Zero-pad feature dims to lane multiples, cast weights to bf16.

    Zero padding keeps the valid part of every layer bit-identical to the
    unpadded computation.  The padded lanes of b3 are set to -1e30 so the
    action-lane mask is free (w3's padded columns are zero, so padded logits
    come out as exactly -1e30 and vanish in the softmax normalizer).
    """
    w1, b1, w2, b2, w3, b3 = params
    s, h = w1.shape
    a = w3.shape[1]
    s_p, h_p, a_p = _round_up(s, LANE), _round_up(h, LANE), _round_up(a, LANE)

    def pad2(arr, rows, cols, fill=0.0):
        r, c = arr.shape
        return jnp.pad(arr, ((0, rows - r), (0, cols - c)), constant_values=fill)

    return (
        pad2(w1, s_p, h_p).astype(jnp.bfloat16),
        pad2(b1, 1, h_p).astype(jnp.float32),
        pad2(w2, h_p, h_p).astype(jnp.bfloat16),
        pad2(b2, 1, h_p).astype(jnp.float32),
        pad2(w3, h_p, a_p).astype(jnp.bfloat16),
        pad2(b3, 1, a_p, fill=_NEG_BIG).astype(jnp.float32),   # mask folded in
    )


# --------------------------------------------------------------------------- #
# Chip-aware VMEM budget and batch-tile selection
# --------------------------------------------------------------------------- #
def _vmem_budget_bytes():
    try:
        kind = jax.devices()[0].device_kind.lower()
    except Exception:
        kind = ""
    if "v7" in kind or "7x" in kind:
        # v7x has 64 MiB VMEM per TensorCore; leave headroom for Mosaic scratch.
        return 48 * 1024 * 1024
    # v5e / v6e have 128 MiB physical VMEM; the default scoped limit undersizes it.
    return 100 * 1024 * 1024


def _pick_batch_tile(B, s_pad, h_pad, a_pad, budget, weight_buf_count):
    """Largest batch tile that fits the VMEM budget, avoiding dead grid steps."""
    # Resident weights (bf16) + biases (f32), times their buffer count.
    resident = weight_buf_count * (
        2 * (s_pad * h_pad + h_pad * h_pad + h_pad * a_pad)
        + 4 * (2 * h_pad + a_pad))
    # Per-batch-row streaming bytes: x tile (bf16, 2 bufs) + out tile (f32, 2 bufs)
    # + f32 intermediates (h1, h2, logits).
    per_row = 2 * s_pad * 2 + 2 * a_pad * 4 + 4 * (2 * h_pad + a_pad)
    avail = max(budget - resident - (4 << 20), per_row * SUBLANE)
    cap = max(SUBLANE, min(1024, (avail // per_row) // SUBLANE * SUBLANE))

    if B <= cap:
        n_tiles = 1
        tb = _round_up(max(B, 1), SUBLANE)
    else:
        # Spread B over the fewest tiles <= cap so no grid step is fully padded.
        n_tiles = -(-B // cap)
        tb = _round_up(-(-B // n_tiles), SUBLANE)
    return tb, tb * n_tiles


# --------------------------------------------------------------------------- #
# Wrapper
# --------------------------------------------------------------------------- #
def actor_forward(x, padded_params, action_dim):
    """log_softmax(fc3(relu(fc2(relu(fc1(x)))))) -> (B, action_dim)."""
    w1, b1, w2, b2, w3, b3 = padded_params
    s_pad, h_pad = w1.shape
    a_pad = w3.shape[1]

    B, S = x.shape
    budget = _vmem_budget_bytes()
    tb, b_pad = _pick_batch_tile(B, s_pad, h_pad, a_pad, budget,
                                 weight_buf_count=1)
    n_steps = b_pad // tb

    x_p = jnp.pad(x, ((0, b_pad - B), (0, s_pad - S))).astype(jnp.bfloat16)

    # Megacore split only pays off with >= 2 grid steps; otherwise both TCs would
    # each DMA a private copy of the resident weights for no batch work.
    semantics = ("parallel",) if n_steps >= 2 else ("arbitrary",)

    def run(single_buffer_weights):
        if single_buffer_weights:
            def resident(shape):
                return pl.BlockSpec(shape, lambda i: (0, 0),
                                    pipeline_mode=pl.Buffered(1))
        else:
            def resident(shape):
                return pl.BlockSpec(shape, lambda i: (0, 0))

        in_specs = [
            pl.BlockSpec((tb, s_pad), lambda i: (i, 0)),   # x: streams, double-buffered
            resident((s_pad, h_pad)),                      # w1: VMEM-resident
            resident((1, h_pad)),                          # b1
            resident((h_pad, h_pad)),                      # w2
            resident((1, h_pad)),                          # b2
            resident((h_pad, a_pad)),                      # w3
            resident((1, a_pad)),                          # b3 (padded lanes = -1e30)
        ]
        out_spec = pl.BlockSpec((tb, a_pad), lambda i: (i, 0))  # lane-dense slab

        return pl.pallas_call(
            actor_kernel,
            out_shape=jax.ShapeDtypeStruct((b_pad, a_pad), jnp.float32),
            grid=(n_steps,),
            in_specs=in_specs,
            out_specs=out_spec,
            compiler_params=pltpu.CompilerParams(
                dimension_semantics=semantics,
                vmem_limit_bytes=budget,
            ),
        )(x_p, w1, b1, w2, b2, w3, b3)

    try:
        # Preferred: constant-index weights single-buffered (halves resident VMEM).
        out = run(single_buffer_weights=True)
    except Exception:
        # Fallback for jax/libtpu builds that reject pipeline_mode / Buffered(1);
        # identical semantics with default double-buffering.
        out = run(single_buffer_weights=False)

    # Slice padded batch rows / action lanes off in the wrapper (cheap XLA slice).
    return out[:B, :action_dim]


def make_categorical(log_probs):
    # The PyTorch forward passes log_softmax output positionally to
    # Categorical(probs=...); here we expose the mathematically correct
    # probs/logits built from the log-probs.
    # TODO(synk): torch.distributions.Categorical (sampling API, entropy, ...)
    # has no Pallas equivalent; only probs/logits are reproduced.
    return {"probs": jnp.exp(log_probs), "logits": log_probs}


# --------------------------------------------------------------------------- #
# Init + reference
# --------------------------------------------------------------------------- #
def init_params(key, state_dim, action_dim, hidden_size):
    """xavier_uniform weights + 0.01 biases (matches init_weights), (in,out) layout."""
    def xavier(k, fan_in, fan_out):
        bound = math.sqrt(6.0 / (fan_in + fan_out))
        return jax.random.uniform(k, (fan_in, fan_out), jnp.float32,
                                  minval=-bound, maxval=bound)

    k1, k2, k3 = jax.random.split(key, 3)
    w1 = xavier(k1, state_dim, hidden_size)
    w2 = xavier(k2, hidden_size, hidden_size)
    w3 = xavier(k3, hidden_size, action_dim)
    b1 = jnp.full((1, hidden_size), 0.01, jnp.float32)
    b2 = jnp.full((1, hidden_size), 0.01, jnp.float32)
    b3 = jnp.full((1, action_dim), 0.01, jnp.float32)
    return (w1, b1, w2, b2, w3, b3)


def reference_forward(x, params):
    """Pure-JAX reference with the same bf16-operand / f32-accumulate rounding."""
    w1, b1, w2, b2, w3, b3 = params
    xb = x.astype(jnp.bfloat16)
    h1 = jnp.maximum(
        jnp.dot(xb, w1.astype(jnp.bfloat16),
                preferred_element_type=jnp.float32) + b1, 0.0)
    h2 = jnp.maximum(
        jnp.dot(h1.astype(jnp.bfloat16), w2.astype(jnp.bfloat16),
                preferred_element_type=jnp.float32) + b2, 0.0)
    logits = jnp.dot(h2.astype(jnp.bfloat16), w3.astype(jnp.bfloat16),
                     preferred_element_type=jnp.float32) + b3
    return jax.nn.log_softmax(logits, axis=1)


if __name__ == "__main__":
    key = jax.random.PRNGKey(0)
    k_in, k_par = jax.random.split(key)

    batch, state_dim, hidden_size, action_dim = 2, 16, 32, 4
    x = jax.random.normal(k_in, (batch, state_dim), jnp.float32)
    params = init_params(k_par, state_dim, action_dim, hidden_size)

    # Pad/cast once (amortized across calls; mask folded into b3 here).
    padded_params = pad_params(params)

    log_probs = actor_forward(x, padded_params, action_dim)
    log_probs = jax.block_until_ready(log_probs)

    ref = reference_forward(x, params)
    assert log_probs.shape == (batch, action_dim)
    assert jnp.allclose(log_probs, ref, atol=2e-3, rtol=2e-3), "mismatch vs reference"
    # log-softmax rows must exponentiate to a valid distribution.
    assert jnp.allclose(jnp.sum(jnp.exp(log_probs), axis=-1), 1.0, atol=1e-3)

    dist = make_categorical(log_probs)
    jax.block_until_ready(dist["probs"])

    print("KERNEL_OK")
</pallas_src>

<mosaic_0001>
module attributes {stable_mosaic.version = 11 : i64} {
  func.func @actor_kernel(%arg0: i32, %arg1: memref<16x128xbf16, #tpu.memory_space<vmem>>, %arg2: memref<128x128xbf16, #tpu.memory_space<vmem>>, %arg3: memref<1x128xf32, #tpu.memory_space<vmem>>, %arg4: memref<128x128xbf16, #tpu.memory_space<vmem>>, %arg5: memref<1x128xf32, #tpu.memory_space<vmem>>, %arg6: memref<128x128xbf16, #tpu.memory_space<vmem>>, %arg7: memref<1x128xf32, #tpu.memory_space<vmem>>, %arg8: memref<16x128xf32, #tpu.memory_space<vmem>>) attributes {dimension_semantics = [#tpu.dimension_semantics<arbitrary>], iteration_bounds = array<i64: 1>, scalar_prefetch = 0 : i64, scratch_operands = 0 : i64, tpu.core_type = #tpu.core_type<tc>, window_params = [{transform_indices = @transform_0, window_bounds = array<i64: 16, 128>}, {pipeline_mode = #tpu.pipeline_mode<synchronous>, transform_indices = @transform_1, window_bounds = array<i64: 128, 128>}, {pipeline_mode = #tpu.pipeline_mode<synchronous>, transform_indices = @transform_2, window_bounds = array<i64: 1, 128>}, {pipeline_mode = #tpu.pipeline_mode<synchronous>, transform_indices = @transform_3, window_bounds = array<i64: 128, 128>}, {pipeline_mode = #tpu.pipeline_mode<synchronous>, transform_indices = @transform_4, window_bounds = array<i64: 1, 128>}, {pipeline_mode = #tpu.pipeline_mode<synchronous>, transform_indices = @transform_5, window_bounds = array<i64: 128, 128>}, {pipeline_mode = #tpu.pipeline_mode<synchronous>, transform_indices = @transform_6, window_bounds = array<i64: 1, 128>}, {transform_indices = @transform_7, window_bounds = array<i64: 16, 128>}]} {
    %c0 = arith.constant 0 : index
    %c0_0 = arith.constant 0 : index
    %0 = vector.load %arg1[%c0, %c0_0] : memref<16x128xbf16, #tpu.memory_space<vmem>>, vector<16x128xbf16>
    %c0_1 = arith.constant 0 : index
    %c0_2 = arith.constant 0 : index
    %1 = vector.load %arg2[%c0_1, %c0_2] : memref<128x128xbf16, #tpu.memory_space<vmem>>, vector<128x128xbf16>
    %cst = arith.constant dense<0.000000e+00> : vector<16x128xf32>
    %2 = tpu.matmul %0, %1, %cst {dimension_numbers = #tpu.dot_dimension_numbers<[1], [0], [0], [1], [0, 0, 1, 1], [], []>} : vector<16x128xbf16>, vector<128x128xbf16>, vector<16x128xf32> -> vector<16x128xf32>
    %c0_3 = arith.constant 0 : index
    %c0_4 = arith.constant 0 : index
    %3 = vector.load %arg3[%c0_3, %c0_4] : memref<1x128xf32, #tpu.memory_space<vmem>>, vector<1x128xf32>
    %4 = vector.broadcast %3 : vector<1x128xf32> to vector<16x128xf32>
    %5 = arith.addf %2, %4 : vector<16x128xf32>
    %cst_5 = arith.constant 0.000000e+00 : f32
    %6 = vector.broadcast %cst_5 : f32 to vector<16x128xf32>
    %7 = arith.maximumf %5, %6 : vector<16x128xf32>
    %8 = arith.truncf %7 : vector<16x128xf32> to vector<16x128xbf16>
    %c0_6 = arith.constant 0 : index
    %c0_7 = arith.constant 0 : index
    %9 = vector.load %arg4[%c0_6, %c0_7] : memref<128x128xbf16, #tpu.memory_space<vmem>>, vector<128x128xbf16>
    %cst_8 = arith.constant dense<0.000000e+00> : vector<16x128xf32>
    %10 = tpu.matmul %8, %9, %cst_8 {dimension_numbers = #tpu.dot_dimension_numbers<[1], [0], [0], [1], [0, 0, 1, 1], [], []>} : vector<16x128xbf16>, vector<128x128xbf16>, vector<16x128xf32> -> vector<16x128xf32>
    %c0_9 = arith.constant 0 : index
    %c0_10 = arith.constant 0 : index
    %11 = vector.load %arg5[%c0_9, %c0_10] : memref<1x128xf32, #tpu.memory_space<vmem>>, vector<1x128xf32>
    %12 = vector.broadcast %11 : vector<1x128xf32> to vector<16x128xf32>
    %13 = arith.addf %10, %12 : vector<16x128xf32>
    %cst_11 = arith.constant 0.000000e+00 : f32
    %14 = vector.broadcast %cst_11 : f32 to vector<16x128xf32>
    %15 = arith.maximumf %13, %14 : vector<16x128xf32>
    %16 = arith.truncf %15 : vector<16x128xf32> to vector<16x128xbf16>
    %c0_12 = arith.constant 0 : index
    %c0_13 = arith.constant 0 : index
    %17 = vector.load %arg6[%c0_12, %c0_13] : memref<128x128xbf16, #tpu.memory_space<vmem>>, vector<128x128xbf16>
    %cst_14 = arith.constant dense<0.000000e+00> : vector<16x128xf32>
    %18 = tpu.matmul %16, %17, %cst_14 {dimension_numbers = #tpu.dot_dimension_numbers<[1], [0], [0], [1], [0, 0, 1, 1], [], []>} : vector<16x128xbf16>, vector<128x128xbf16>, vector<16x128xf32> -> vector<16x128xf32>
    %c0_15 = arith.constant 0 : index
    %c0_16 = arith.constant 0 : index
    %19 = vector.load %arg7[%c0_15, %c0_16] : memref<1x128xf32, #tpu.memory_space<vmem>>, vector<1x128xf32>
    %20 = vector.broadcast %19 : vector<1x128xf32> to vector<16x128xf32>
    %21 = arith.addf %18, %20 : vector<16x128xf32>
    %cst_17 = arith.constant dense<0xFF800000> : vector<16xf32>
    %22 = vector.multi_reduction <maximumf>, %21, %cst_17 [1] : vector<16x128xf32> to vector<16xf32>
    %23 = vector.shape_cast %22 : vector<16xf32> to vector<16x1xf32>
    %24 = vector.broadcast %23 : vector<16x1xf32> to vector<16x128xf32>
    %25 = arith.subf %21, %24 : vector<16x128xf32>
    %26 = math.exp %25 : vector<16x128xf32>
    %cst_18 = arith.constant dense<0.000000e+00> : vector<16xf32>
    %27 = vector.multi_reduction <add>, %26, %cst_18 [1] : vector<16x128xf32> to vector<16xf32>
    %28 = vector.shape_cast %27 : vector<16xf32> to vector<16x1xf32>
    %29 = math.log %28 : vector<16x1xf32>
    %30 = vector.broadcast %29 : vector<16x1xf32> to vector<16x128xf32>
    %31 = arith.subf %25, %30 : vector<16x128xf32>
    %c0_19 = arith.constant 0 : index
    %c0_20 = arith.constant 0 : index
    %32 = vector.load %arg8[%c0_19, %c0_20] : memref<16x128xf32, #tpu.memory_space<vmem>>, vector<16x128xf32>
    tpu.vector_store %arg8[%c0_19, %c0_20], %31 {strides = array<i32>} : memref<16x128xf32, #tpu.memory_space<vmem>>, vector<16x128xf32>,
    return
  }
  func.func @transform_0(%arg0: i32) -> (i32, i32) {
    %c0_i32 = arith.constant 0 : i32
    %c0_i32_0 = arith.constant 0 : i32
    return %arg0, %c0_i32 : i32, i32
  }
  func.func @transform_1(%arg0: i32) -> (i32, i32) {
    %c0_i32 = arith.constant 0 : i32
    %c0_i32_0 = arith.constant 0 : i32
    %c0_i32_1 = arith.constant 0 : i32
    return %c0_i32, %c0_i32_0 : i32, i32
  }
  func.func @transform_2(%arg0: i32) -> (i32, i32) {
    %c0_i32 = arith.constant 0 : i32
    %c0_i32_0 = arith.constant 0 : i32
    %c0_i32_1 = arith.constant 0 : i32
    return %c0_i32, %c0_i32_0 : i32, i32
  }
  func.func @transform_3(%arg0: i32) -> (i32, i32) {
    %c0_i32 = arith.constant 0 : i32
    %c0_i32_0 = arith.constant 0 : i32
    %c0_i32_1 = arith.constant 0 : i32
    return %c0_i32, %c0_i32_0 : i32, i32
  }
  func.func @transform_4(%arg0: i32) -> (i32, i32) {
    %c0_i32 = arith.constant 0 : i32
    %c0_i32_0 = arith.constant 0 : i32
    %c0_i32_1 = arith.constant 0 : i32
    return %c0_i32, %c0_i32_0 : i32, i32
  }
  func.func @transform_5(%arg0: i32) -> (i32, i32) {
    %c0_i32 = arith.constant 0 : i32
    %c0_i32_0 = arith.constant 0 : i32
    %c0_i32_1 = arith.constant 0 : i32
    return %c0_i32, %c0_i32_0 : i32, i32
  }
  func.func @transform_6(%arg0: i32) -> (i32, i32) {
    %c0_i32 = arith.constant 0 : i32
    %c0_i32_0 = arith.constant 0 : i32
    %c0_i32_1 = arith.constant 0 : i32
    return %c0_i32, %c0_i32_0 : i32, i32
  }
  func.func @transform_7(%arg0: i32) -> (i32, i32) {
    %c0_i32 = arith.constant 0 : i32
    %c0_i32_0 = arith.constant 0 : i32
    return %arg0, %c0_i32 : i32, i32
  }
}

module attributes {stable_mosaic.version = 11 : i64} {
  func.func @actor_kernel(%arg0: i32, %arg1: memref<16x128xbf16, #tpu.memory_space<vmem>>, %arg2: memref<128x128xbf16, #tpu.memory_space<vmem>>, %arg3: memref<1x128xf32, #tpu.memory_space<vmem>>, %arg4: memref<128x128xbf16, #tpu.memory_space<vmem>>, %arg5: memref<1x128xf32, #tpu.memory_space<vmem>>, %arg6: memref<128x128xbf16, #tpu.memory_space<vmem>>, %arg7: memref<1x128xf32, #tpu.memory_space<vmem>>, %arg8: memref<16x128xf32, #tpu.memory_space<vmem>>) attributes {dimension_semantics = [#tpu.dimension_semantics<arbitrary>], iteration_bounds = array<i64: 1>, scalar_prefetch = 0 : i64, scratch_operands = 0 : i64, tpu.core_type = #tpu.core_type<tc>, window_params = [{transform_indices = @transform_0, window_bounds = array<i64: 16, 128>}, {pipeline_mode = #tpu.pipeline_mode<synchronous>, transform_indices = @transform_1, window_bounds = array<i64: 128, 128>}, {pipeline_mode = #tpu.pipeline_mode<synchronous>, transform_indices = @transform_2, window_bounds = array<i64: 1, 128>}, {pipeline_mode = #tpu.pipeline_mode<synchronous>, transform_indices = @transform_3, window_bounds = array<i64: 128, 128>}, {pipeline_mode = #tpu.pipeline_mode<synchronous>, transform_indices = @transform_4, window_bounds = array<i64: 1, 128>}, {pipeline_mode = #tpu.pipeline_mode<synchronous>, transform_indices = @transform_5, window_bounds = array<i64: 128, 128>}, {pipeline_mode = #tpu.pipeline_mode<synchronous>, transform_indices = @transform_6, window_bounds = array<i64: 1, 128>}, {transform_indices = @transform_7, window_bounds = array<i64: 16, 128>}]} {
    %c0 = arith.constant 0 : index
    %c0_0 = arith.constant 0 : index
    %0 = vector.load %arg1[%c0, %c0_0] : memref<16x128xbf16, #tpu.memory_space<vmem>>, vector<16x128xbf16>
    %c0_1 = arith.constant 0 : index
    %c0_2 = arith.constant 0 : index
    %1 = vector.load %arg2[%c0_1, %c0_2] : memref<128x128xbf16, #tpu.memory_space<vmem>>, vector<128x128xbf16>
    %cst = arith.constant dense<0.000000e+00> : vector<16x128xf32>
    %2 = tpu.matmul %0, %1, %cst {dimension_numbers = #tpu.dot_dimension_numbers<[1], [0], [0], [1], [0, 0, 1, 1], [], []>} : vector<16x128xbf16>, vector<128x128xbf16>, vector<16x128xf32> -> vector<16x128xf32>
    %c0_3 = arith.constant 0 : index
    %c0_4 = arith.constant 0 : index
    %3 = vector.load %arg3[%c0_3, %c0_4] : memref<1x128xf32, #tpu.memory_space<vmem>>, vector<1x128xf32>
    %4 = vector.broadcast %3 : vector<1x128xf32> to vector<16x128xf32>
    %5 = arith.addf %2, %4 : vector<16x128xf32>
    %cst_5 = arith.constant 0.000000e+00 : f32
    %6 = vector.broadcast %cst_5 : f32 to vector<16x128xf32>
    %7 = arith.maximumf %5, %6 : vector<16x128xf32>
    %8 = arith.truncf %7 : vector<16x128xf32> to vector<16x128xbf16>
    %c0_6 = arith.constant 0 : index
    %c0_7 = arith.constant 0 : index
    %9 = vector.load %arg4[%c0_6, %c0_7] : memref<128x128xbf16, #tpu.memory_space<vmem>>, vector<128x128xbf16>
    %cst_8 = arith.constant dense<0.000000e+00> : vector<16x128xf32>
    %10 = tpu.matmul %8, %9, %cst_8 {dimension_numbers = #tpu.dot_dimension_numbers<[1], [0], [0], [1], [0, 0, 1, 1], [], []>} : vector<16x128xbf16>, vector<128x128xbf16>, vector<16x128xf32> -> vector<16x128xf32>
    %c0_9 = arith.constant 0 : index
    %c0_10 = arith.constant 0 : index
    %11 = vector.load %arg5[%c0_9, %c0_10] : memref<1x128xf32, #tpu.memory_space<vmem>>, vector<1x128xf32>
    %12 = vector.broadcast %11 : vector<1x128xf32> to vector<16x128xf32>
    %13 = arith.addf %10, %12 : vector<16x128xf32>
    %cst_11 = arith.constant 0.000000e+00 : f32
    %14 = vector.broadcast %cst_11 : f32 to vector<16x128xf32>
    %15 = arith.maximumf %13, %14 : vector<16x128xf32>
    %16 = arith.truncf %15 : vector<16x128xf32> to vector<16x128xbf16>
    %c0_12 = arith.constant 0 : index
    %c0_13 = arith.constant 0 : index
    %17 = vector.load %arg6[%c0_12, %c0_13] : memref<128x128xbf16, #tpu.memory_space<vmem>>, vector<128x128xbf16>
    %cst_14 = arith.constant dense<0.000000e+00> : vector<16x128xf32>
    %18 = tpu.matmul %16, %17, %cst_14 {dimension_numbers = #tpu.dot_dimension_numbers<[1], [0], [0], [1], [0, 0, 1, 1], [], []>} : vector<16x128xbf16>, vector<128x128xbf16>, vector<16x128xf32> -> vector<16x128xf32>
    %c0_15 = arith.constant 0 : index
    %c0_16 = arith.constant 0 : index
    %19 = vector.load %arg7[%c0_15, %c0_16] : memref<1x128xf32, #tpu.memory_space<vmem>>, vector<1x128xf32>
    %20 = vector.broadcast %19 : vector<1x128xf32> to vector<16x128xf32>
    %21 = arith.addf %18, %20 : vector<16x128xf32>
    %cst_17 = arith.constant dense<0xFF800000> : vector<16xf32>
    %22 = vector.multi_reduction <maximumf>, %21, %cst_17 [1] : vector<16x128xf32> to vector<16xf32>
    %23 = vector.shape_cast %22 : vector<16xf32> to vector<16x1xf32>
    %24 = vector.broadcast %23 : vector<16x1xf32> to vector<16x128xf32>
    %25 = arith.subf %21, %24 : vector<16x128xf32>
    %26 = math.exp %25 : vector<16x128xf32>
    %cst_18 = arith.constant dense<0.000000e+00> : vector<16xf32>
    %27 = vector.multi_reduction <add>, %26, %cst_18 [1] : vector<16x128xf32> to vector<16xf32>
    %28 = vector.shape_cast %27 : vector<16xf32> to vector<16x1xf32>
    %29 = math.log %28 : vector<16x1xf32>
    %30 = vector.broadcast %29 : vector<16x1xf32> to vector<16x128xf32>
    %31 = arith.subf %25, %30 : vector<16x128xf32>
    %c0_19 = arith.constant 0 : index
    %c0_20 = arith.constant 0 : index
    %32 = vector.load %arg8[%c0_19, %c0_20] : memref<16x128xf32, #tpu.memory_space<vmem>>, vector<16x128xf32>
    tpu.vector_store %arg8[%c0_19, %c0_20], %31 {strides = array<i32>} : memref<16x128xf32, #tpu.memory_space<vmem>>, vector<16x128xf32>,
    return
  }
  func.func @transform_0(%arg0: i32) -> (i32, i32) {
    %c0_i32 = arith.constant 0 : i32
    %c0_i32_0 = arith.constant 0 : i32
    return %arg0, %c0_i32 : i32, i32
  }
  func.func @transform_1(%arg0: i32) -> (i32, i32) {
    %c0_i32 = arith.constant 0 : i32
    %c0_i32_0 = arith.constant 0 : i32
    %c0_i32_1 = arith.constant 0 : i32
    return %c0_i32, %c0_i32_0 : i32, i32
  }
  func.func @transform_2(%arg0: i32) -> (i32, i32) {
    %c0_i32 = arith.constant 0 : i32
    %c0_i32_0 = arith.constant 0 : i32
    %c0_i32_1 = arith.constant 0 : i32
    return %c0_i32, %c0_i32_0 : i32, i32
  }
  func.func @transform_3(%arg0: i32) -> (i32, i32) {
    %c0_i32 = arith.constant 0 : i32
    %c0_i32_0 = arith.constant 0 : i32
    %c0_i32_1 = arith.constant 0 : i32
    return %c0_i32, %c0_i32_0 : i32, i32
  }
  func.func @transform_4(%arg0: i32) -> (i32, i32) {
    %c0_i32 = arith.constant 0 : i32
    %c0_i32_0 = arith.constant 0 : i32
    %c0_i32_1 = arith.constant 0 : i32
    return %c0_i32, %c0_i32_0 : i32, i32
  }
  func.func @transform_5(%arg0: i32) -> (i32, i32) {
    %c0_i32 = arith.constant 0 : i32
    %c0_i32_0 = arith.constant 0 : i32
    %c0_i32_1 = arith.constant 0 : i32
    return %c0_i32, %c0_i32_0 : i32, i32
  }
  func.func @transform_6(%arg0: i32) -> (i32, i32) {
    %c0_i32 = arith.constant 0 : i32
    %c0_i32_0 = arith.constant 0 : i32
    %c0_i32_1 = arith.constant 0 : i32
    return %c0_i32, %c0_i32_0 : i32, i32
  }
  func.func @transform_7(%arg0: i32) -> (i32, i32) {
    %c0_i32 = arith.constant 0 : i32
    %c0_i32_0 = arith.constant 0 : i32
    return %arg0, %c0_i32 : i32, i32
  }
}

</mosaic_0001>

<llo_original>
// kernel: tpu_custom_call.1
$region0: #{tpu_custom_call.1}
  #allocation0 [shape = 'u32[]', space=smem, size = 0x4, offset = 0x4, fixed_abs, tag = 'smem constant byte address 0x4 - core index']
  #allocation1 [shape = 'u32[144,128]{1,0:T(1,128)}', space=vmem, size = 0x12000, scoped, tag = 'internal scratch']
  %s0 = inlined_call_operand.hbm [shape: bf16[16,128], index: 0, kind: input, shape index: {}]
  %s1 = inlined_call_operand.hbm [shape: bf16[128,128], index: 1, kind: input, shape index: {}]
  %s2 = inlined_call_operand.vmem [shape: f32[1,128], index: 2, kind: input, shape index: {}]
  %s3 = inlined_call_operand.hbm [shape: bf16[128,128], index: 3, kind: input, shape index: {}]
  %s4 = inlined_call_operand.vmem [shape: f32[1,128], index: 4, kind: input, shape index: {}]
  %s5 = inlined_call_operand.hbm [shape: bf16[128,128], index: 5, kind: input, shape index: {}]
  %s6 = inlined_call_operand.vmem [shape: f32[1,128], index: 6, kind: input, shape index: {}]
  %s7 = inlined_call_operand.hbm [shape: f32[16,128], index: 7, kind: output, shape index: {}]
  %s8 = sld [smem:[#allocation0]]
  $region54: #{tpu_custom_call.1} parent=0
    _
  %s10 = ssub.s32 1, %s8
  %s11 = scalar_select 0, %s10, %s8
  $region1: #{tpu_custom_call.1} parent=0
    #allocation2 [shape = 'u8[4096]{0}', space=vmem, size = 0x1000, scoped, tag = 'input window, operand 0, single buffered']
    #allocation3 [shape = 's32[1]{0}', space=sflag, size = 0x4, scoped, tag = 'scoped memory for tpu_custom_call.1']
    #allocation4 [shape = 's32[1]{0}', space=sflag, size = 0x4, scoped, tag = 'scoped memory for tpu_custom_call.1']
    #allocation5 [shape = 'u8[32768]{0}', space=vmem, size = 0x8000, scoped, tag = 'input window, operand 1, single buffered']
    #allocation6 [shape = 's32[1]{0}', space=sflag, size = 0x4, scoped, tag = 'scoped memory for tpu_custom_call.1']
    #allocation7 [shape = 'u8[32768]{0}', space=vmem, size = 0x8000, scoped, tag = 'input window, operand 3, single buffered']
    #allocation8 [shape = 'u8[32768]{0}', space=vmem, size = 0x8000, scoped, tag = 'input window, operand 5, single buffered']
    #allocation9 [shape = 's32[1]{0}', space=sflag, size = 0x4, scoped, tag = 'scoped memory for tpu_custom_call.1']
    #allocation10 [shape = 'u8[8192]{0}', space=vmem, size = 0x2000, scoped, tag = 'output window, operand 0, single buffered']
    %12 = vsyncpa [#allocation3], 0
    %13 = vsyncpa [#allocation6], 0
    %14 = vsyncpa [#allocation9], 0
    %15 = vsyncpa [#allocation4], 0
    // Predicated region
    $region2: #{tpu_custom_call.1} parent=1 // pred_check
      _
    $region3: #{tpu_custom_call.1} parent=1 // pred_check_branch
      %17 = sbr.rel (0) target = $region5
    $region4: #{tpu_custom_call.1} parent=1 // pred_region
      %s19 = ssub.s32 128, 128
      %20 = vsyncadd [#allocation3], %s19
      %s21 = sshll.u32 [#allocation2], 4
      %s22 = int_to_ptr.vmem [resolvable:$true] %s21
      %27 = dma.hbm_to_vmem [thread:$0]  %s0, 128, %s22, [#allocation3], 64, 64, 4
    $region5: #{tpu_custom_call.1} parent=1 // pred_fallthru
      _
    // Predicated region
    $region6: #{tpu_custom_call.1} parent=1 // pred_check
      _
    $region7: #{tpu_custom_call.1} parent=1 // pred_check_branch
      %29 = sbr.rel (0) target = $region9
    $region8: #{tpu_custom_call.1} parent=1 // pred_region
      %s31 = ssub.s32 1024, 1024
      %32 = vsyncadd [#allocation6], %s31
      %s33 = sshll.u32 [#allocation5], 4
      %s34 = int_to_ptr.vmem [resolvable:$true] %s33
      %39 = dma.hbm_to_vmem [thread:$0]  %s1, 1024, %s34, [#allocation6], 64, 64, 4
    $region9: #{tpu_custom_call.1} parent=1 // pred_fallthru
      _
    // Predicated region
    $region10: #{tpu_custom_call.1} parent=1 // pred_check
      _
    $region11: #{tpu_custom_call.1} parent=1 // pred_check_branch
      %41 = sbr.rel (0) target = $region13
    $region12: #{tpu_custom_call.1} parent=1 // pred_region
      _
    $region13: #{tpu_custom_call.1} parent=1 // pred_fallthru
      _
    // Predicated region
    $region14: #{tpu_custom_call.1} parent=1 // pred_check
      _
    $region15: #{tpu_custom_call.1} parent=1 // pred_check_branch
      %43 = sbr.rel (0) target = $region17
    $region16: #{tpu_custom_call.1} parent=1 // pred_region
      %s45 = ssub.s32 1024, 1024
      %46 = vsyncadd [#allocation6], %s45
      %s47 = sshll.u32 [#allocation7], 4
      %s48 = int_to_ptr.vmem [resolvable:$true] %s47
      %53 = dma.hbm_to_vmem [thread:$0]  %s3, 1024, %s48, [#allocation6], 64, 64, 4
    $region17: #{tpu_custom_call.1} parent=1 // pred_fallthru
      _
    // Predicated region
    $region18: #{tpu_custom_call.1} parent=1 // pred_check
      _
    $region19: #{tpu_custom_call.1} parent=1 // pred_check_branch
      %55 = sbr.rel (0) target = $region21
    $region20: #{tpu_custom_call.1} parent=1 // pred_region
      _
    $region21: #{tpu_custom_call.1} parent=1 // pred_fallthru
      _
    // Predicated region
    $region22: #{tpu_custom_call.1} parent=1 // pred_check
      _
    $region23: #{tpu_custom_call.1} parent=1 // pred_check_branch
      %57 = sbr.rel (0) target = $region25
    $region24: #{tpu_custom_call.1} parent=1 // pred_region
      %s59 = ssub.s32 1024, 1024
      %60 = vsyncadd [#allocation9], %s59
      %s61 = sshll.u32 [#allocation8], 4
      %s62 = int_to_ptr.vmem [resolvable:$true] %s61
      %67 = dma.hbm_to_vmem [thread:$0]  %s5, 1024, %s62, [#allocation9], 64, 64, 4
    $region25: #{tpu_custom_call.1} parent=1 // pred_fallthru
      _
    // Predicated region
    $region26: #{tpu_custom_call.1} parent=1 // pred_check
      _
    $region27: #{tpu_custom_call.1} parent=1 // pred_check_branch
      %69 = sbr.rel (0) target = $region29
    $region28: #{tpu_custom_call.1} parent=1 // pred_region
      _
    $region29: #{tpu_custom_call.1} parent=1 // pred_fallthru
      _
    // Predicated region
    $region30: #{tpu_custom_call.1} parent=1 // pred_check
      _
    $region31: #{tpu_custom_call.1} parent=1 // pred_check_branch
      %71 = sbr.rel (0) target = $region33
    $region32: #{tpu_custom_call.1} parent=1 // pred_region
      %72 = dma.done [#allocation3], 128
    $region33: #{tpu_custom_call.1} parent=1 // pred_fallthru
      _
    // Predicated region
    $region34: #{tpu_custom_call.1} parent=1 // pred_check
      _
    $region35: #{tpu_custom_call.1} parent=1 // pred_check_branch
      %74 = sbr.rel (0) target = $region37
    $region36: #{tpu_custom_call.1} parent=1 // pred_region
      %75 = dma.done [#allocation6], 1024
    $region37: #{tpu_custom_call.1} parent=1 // pred_fallthru
      _
    // Predicated region
    $region38: #{tpu_custom_call.1} parent=1 // pred_check
      _
    $region39: #{tpu_custom_call.1} parent=1 // pred_check_branch
      %77 = sbr.rel (0) target = $region41
    $region40: #{tpu_custom_call.1} parent=1 // pred_region
      %78 = dma.done [#allocation6], 1024
    $region41: #{tpu_custom_call.1} parent=1 // pred_fallthru
      _
    // Predicated region
    $region42: #{tpu_custom_call.1} parent=1 // pred_check
      _
    $region43: #{tpu_custom_call.1} parent=1 // pred_check_branch
      %80 = sbr.rel (0) target = $region45
    $region44: #{tpu_custom_call.1} parent=1 // pred_region
      %81 = dma.done [#allocation9], 1024
    $region45: #{tpu_custom_call.1} parent=1 // pred_fallthru
      _
    %v83 = vld [vmem:[#allocation2] sm:$0xf]
    %v84 = vld [vmem:[#allocation2 + $0x4] sm:$0xf]
    %v85 = vld [vmem:[#allocation5] sm:$0xf]
    %v86 = vld [vmem:[#allocation5 + $0x4] sm:$0xf]
    %v87 = vld [vmem:[#allocation5 + $0x8] sm:$0xf]
    %v88 = vld [vmem:[#allocation5 + $0xc] sm:$0xf]
    %v89 = vld [vmem:[#allocation5 + $0x10] sm:$0xf]
    %v90 = vld [vmem:[#allocation5 + $0x14] sm:$0xf]
    %v91 = vld [vmem:[#allocation5 + $0x18] sm:$0xf]
    %v92 = vld [vmem:[#allocation5 + $0x1c] sm:$0xf]
    %v93 = vld [vmem:[#allocation5 + $0x20] sm:$0xf]
    %v94 = vld [vmem:[#allocation5 + $0x24] sm:$0xf]
    %v95 = vld [vmem:[#allocation5 + $0x28] sm:$0xf]
    %v96 = vld [vmem:[#allocation5 + $0x2c] sm:$0xf]
    %v97 = vld [vmem:[#allocation5 + $0x30] sm:$0xf]
    %v98 = vld [vmem:[#allocation5 + $0x34] sm:$0xf]
    %v99 = vld [vmem:[#allocation5 + $0x38] sm:$0xf]
    %v100 = vld [vmem:[#allocation5 + $0x3c] sm:$0xf]
    %v101 = vld [vmem:[%s2] sm:$0x1]
    %v103 = vlaneseq
    %v104 = vshrl.u32 %v103, 7
    %v105 = vsub.s32 0, %v104
    %v106 = vrot.slane %v101, %v105
    %v110 = vunpack.c.l.b16 %v83
    %v111 = vunpack.c.l.b16 %v84
    %v112 = vpack.c.b16 %v111, %v110
    %v130 = vunpack.c.l.b16 %v85
    %v131 = vunpack.c.l.b16 %v86
    %v132 = vunpack.c.l.b16 %v87
    %v133 = vunpack.c.l.b16 %v88
    %v134 = vunpack.c.l.b16 %v89
    %v135 = vunpack.c.l.b16 %v90
    %v136 = vunpack.c.l.b16 %v91
    %v137 = vunpack.c.l.b16 %v92
    %v138 = vunpack.c.l.b16 %v93
    %v139 = vunpack.c.l.b16 %v94
    %v140 = vunpack.c.l.b16 %v95
    %v141 = vunpack.c.l.b16 %v96
    %v142 = vunpack.c.l.b16 %v97
    %v143 = vunpack.c.l.b16 %v98
    %v144 = vunpack.c.l.b16 %v99
    %v145 = vunpack.c.l.b16 %v100
    %v146 = vpack.c.b16 %v131, %v130
    %v147 = vpack.c.b16 %v133, %v132
    %v148 = vpack.c.b16 %v135, %v134
    %v149 = vpack.c.b16 %v137, %v136
    %v150 = vpack.c.b16 %v139, %v138
    %v151 = vpack.c.b16 %v141, %v140
    %v152 = vpack.c.b16 %v143, %v142
    %v153 = vpack.c.b16 %v145, %v144
    %162 = vmatprep.subr.bf16.mxu0 0
    %163 = vmatpush1.bf16.msra.mxu0 %v153
    %164 = vmatprep.subr.bf16.mxu0 0
    %165 = vmatpush1.bf16.msra.mxu0 %v152
    %166 = vmatprep.subr.bf16.mxu0 0
    %167 = vmatpush1.bf16.msra.mxu0 %v151
    %168 = vmatprep.subr.bf16.mxu0 0
    %169 = vmatpush1.bf16.msra.mxu0 %v150
    %170 = vmatprep.subr.bf16.mxu0 0
    %171 = vmatpush1.bf16.msra.mxu0 %v149
    %172 = vmatprep.subr.bf16.mxu0 0
    %173 = vmatpush1.bf16.msra.mxu0 %v148
    %174 = vmatprep.subr.bf16.mxu0 0
    %175 = vmatpush1.bf16.msra.mxu0 %v147
    %176 = vmatprep.subr.bf16.mxu0 0
    %177 = vmatpush1.bf16.msra.mxu0 %v146
    %178 = vmatprep.subr.bf16.mxu0 0
    %179 = vmatpush2.bf16.msra.mxu0 0
    %180 = vmatprep.subr.bf16.mxu0 0
    %181 = vmatpush2.bf16.msra.mxu0 0
    %182 = vmatprep.subr.bf16.mxu0 0
    %183 = vmatpush2.bf16.msra.mxu0 0
    %184 = vmatprep.subr.bf16.mxu0 0
    %185 = vmatpush2.bf16.msra.mxu0 0
    %186 = vmatprep.subr.bf16.mxu0 0
    %187 = vmatpush2.bf16.msra.mxu0 0
    %188 = vmatprep.subr.bf16.mxu0 0
    %189 = vmatpush2.bf16.msra.mxu0 0
    %190 = vmatprep.subr.bf16.mxu0 0
    %191 = vmatpush2.bf16.msra.mxu0 0
    %192 = vmatprep.subr.bf16.mxu0 0
    %193 = vmatpush2.bf16.msra.mxu0 0
    %194 = vmatprep.mubr.bf16.mxu0 0
    %195 = vmatmul.mubr.bf16.gmra.mxu0 %v112
    %v196 = vpop.f32.mrf.mxu0
    %v197 = vadd.f32 %v106, %v196
    %v198 = vpop.f32.mrf.mxu0
    %v199 = vpop.f32.mrf.mxu0
    %v200 = vadd.f32 %v106, %v199
    %v201 = vpop.f32.mrf.mxu0
    %202 = vdwg.mxu0
    %v203 = vmax.f32 %v197, 0.0
    %v204 = vmax.f32 %v200, 0.0
    %v205 = vpack.c.bf16 %v204, %v203
    %v206 = vld [vmem:[#allocation7] sm:$0xf]
    %v207 = vld [vmem:[#allocation7 + $0x4] sm:$0xf]
    %v208 = vld [vmem:[#allocation7 + $0x8] sm:$0xf]
    %v209 = vld [vmem:[#allocation7 + $0xc] sm:$0xf]
    %v210 = vld [vmem:[#allocation7 + $0x10] sm:$0xf]
    %v211 = vld [vmem:[#allocation7 + $0x14] sm:$0xf]
    %v212 = vld [vmem:[#allocation7 + $0x18] sm:$0xf]
    %v213 = vld [vmem:[#allocation7 + $0x1c] sm:$0xf]
    %v214 = vld [vmem:[#allocation7 + $0x20] sm:$0xf]
    %v215 = vld [vmem:[#allocation7 + $0x24] sm:$0xf]
    %v216 = vld [vmem:[#allocation7 + $0x28] sm:$0xf]
    %v217 = vld [vmem:[#allocation7 + $0x2c] sm:$0xf]
    %v218 = vld [vmem:[#allocation7 + $0x30] sm:$0xf]
    %v219 = vld [vmem:[#allocation7 + $0x34] sm:$0xf]
    %v220 = vld [vmem:[#allocation7 + $0x38] sm:$0xf]
    %v221 = vld [vmem:[#allocation7 + $0x3c] sm:$0xf]
    %v222 = vld [vmem:[%s4] sm:$0x1]
    %v224 = vlaneseq
    %v225 = vshrl.u32 %v224, 7
    %v226 = vsub.s32 0, %v225
    %v227 = vrot.slane %v222, %v226
    %v245 = vunpack.c.l.b16 %v206
    %v246 = vunpack.c.l.b16 %v207
    %v247 = vunpack.c.l.b16 %v208
    %v248 = vunpack.c.l.b16 %v209
    %v249 = vunpack.c.l.b16 %v210
    %v250 = vunpack.c.l.b16 %v211
    %v251 = vunpack.c.l.b16 %v212
    %v252 = vunpack.c.l.b16 %v213
    %v253 = vunpack.c.l.b16 %v214
    %v254 = vunpack.c.l.b16 %v215
    %v255 = vunpack.c.l.b16 %v216
    %v256 = vunpack.c.l.b16 %v217
    %v257 = vunpack.c.l.b16 %v218
    %v258 = vunpack.c.l.b16 %v219
    %v259 = vunpack.c.l.b16 %v220
    %v260 = vunpack.c.l.b16 %v221
    %v261 = vpack.c.b16 %v246, %v245
    %v262 = vpack.c.b16 %v248, %v247
    %v263 = vpack.c.b16 %v250, %v249
    %v264 = vpack.c.b16 %v252, %v251
    %v265 = vpack.c.b16 %v254, %v253
    %v266 = vpack.c.b16 %v256, %v255
    %v267 = vpack.c.b16 %v258, %v257
    %v268 = vpack.c.b16 %v260, %v259
    %277 = vmatprep.subr.bf16.mxu0 0
    %278 = vmatpush1.bf16.msra.mxu0 %v268
    %279 = vmatprep.subr.bf16.mxu0 0
    %280 = vmatpush1.bf16.msra.mxu0 %v267
    %281 = vmatprep.subr.bf16.mxu0 0
    %282 = vmatpush1.bf16.msra.mxu0 %v266
    %283 = vmatprep.subr.bf16.mxu0 0
    %284 = vmatpush1.bf16.msra.mxu0 %v265
    %285 = vmatprep.subr.bf16.mxu0 0
    %286 = vmatpush1.bf16.msra.mxu0 %v264
    %287 = vmatprep.subr.bf16.mxu0 0
    %288 = vmatpush1.bf16.msra.mxu0 %v263
    %289 = vmatprep.subr.bf16.mxu0 0
    %290 = vmatpush1.bf16.msra.mxu0 %v262
    %291 = vmatprep.subr.bf16.mxu0 0
    %292 = vmatpush1.bf16.msra.mxu0 %v261
    %293 = vmatprep.subr.bf16.mxu0 0
    %294 = vmatpush2.bf16.msra.mxu0 0
    %295 = vmatprep.subr.bf16.mxu0 0
    %296 = vmatpush2.bf16.msra.mxu0 0
    %297 = vmatprep.subr.bf16.mxu0 0
    %298 = vmatpush2.bf16.msra.mxu0 0
    %299 = vmatprep.subr.bf16.mxu0 0
    %300 = vmatpush2.bf16.msra.mxu0 0
    %301 = vmatprep.subr.bf16.mxu0 0
    %302 = vmatpush2.bf16.msra.mxu0 0
    %303 = vmatprep.subr.bf16.mxu0 0
    %304 = vmatpush2.bf16.msra.mxu0 0
    %305 = vmatprep.subr.bf16.mxu0 0
    %306 = vmatpush2.bf16.msra.mxu0 0
    %307 = vmatprep.subr.bf16.mxu0 0
    %308 = vmatpush2.bf16.msra.mxu0 0
    %309 = vmatprep.mubr.bf16.mxu0 0
    %310 = vmatmul.mubr.bf16.gmra.mxu0 %v205
    %v311 = vpop.f32.mrf.mxu0
    %v312 = vadd.f32 %v227, %v311
    %v313 = vpop.f32.mrf.mxu0
    %v314 = vpop.f32.mrf.mxu0
    %v315 = vadd.f32 %v227, %v314
    %v316 = vpop.f32.mrf.mxu0
    %317 = vdwg.mxu0
    %v318 = vmax.f32 %v312, 0.0
    %v319 = vmax.f32 %v315, 0.0
    %v320 = vpack.c.bf16 %v319, %v318
    %v321 = vld [vmem:[#allocation8] sm:$0xf]
    %v322 = vld [vmem:[#allocation8 + $0x4] sm:$0xf]
    %v323 = vld [vmem:[#allocation8 + $0x8] sm:$0xf]
    %v324 = vld [vmem:[#allocation8 + $0xc] sm:$0xf]
    %v325 = vld [vmem:[#allocation8 + $0x10] sm:$0xf]
    %v326 = vld [vmem:[#allocation8 + $0x14] sm:$0xf]
    %v327 = vld [vmem:[#allocation8 + $0x18] sm:$0xf]
    %v328 = vld [vmem:[#allocation8 + $0x1c] sm:$0xf]
    %v329 = vld [vmem:[#allocation8 + $0x20] sm:$0xf]
    %v330 = vld [vmem:[#allocation8 + $0x24] sm:$0xf]
    %v331 = vld [vmem:[#allocation8 + $0x28] sm:$0xf]
    %v332 = vld [vmem:[#allocation8 + $0x2c] sm:$0xf]
    %v333 = vld [vmem:[#allocation8 + $0x30] sm:$0xf]
    %v334 = vld [vmem:[#allocation8 + $0x34] sm:$0xf]
    %v335 = vld [vmem:[#allocation8 + $0x38] sm:$0xf]
    %v336 = vld [vmem:[#allocation8 + $0x3c] sm:$0xf]
    %v337 = vld [vmem:[%s6] sm:$0x1]
    %v339 = vlaneseq
    %v340 = vshrl.u32 %v339, 7
    %v341 = vsub.s32 0, %v340
    %v342 = vrot.slane %v337, %v341
    %v360 = vunpack.c.l.b16 %v321
    %v361 = vunpack.c.l.b16 %v322
    %v362 = vunpack.c.l.b16 %v323
    %v363 = vunpack.c.l.b16 %v324
    %v364 = vunpack.c.l.b16 %v325
    %v365 = vunpack.c.l.b16 %v326
    %v366 = vunpack.c.l.b16 %v327
    %v367 = vunpack.c.l.b16 %v328
    %v368 = vunpack.c.l.b16 %v329
    %v369 = vunpack.c.l.b16 %v330
    %v370 = vunpack.c.l.b16 %v331
    %v371 = vunpack.c.l.b16 %v332
    %v372 = vunpack.c.l.b16 %v333
    %v373 = vunpack.c.l.b16 %v334
    %v374 = vunpack.c.l.b16 %v335
    %v375 = vunpack.c.l.b16 %v336
    %v376 = vpack.c.b16 %v361, %v360
    %v377 = vpack.c.b16 %v363, %v362
    %v378 = vpack.c.b16 %v365, %v364
    %v379 = vpack.c.b16 %v367, %v366
    %v380 = vpack.c.b16 %v369, %v368
    %v381 = vpack.c.b16 %v371, %v370
    %v382 = vpack.c.b16 %v373, %v372
    %v383 = vpack.c.b16 %v375, %v374
    %392 = vmatprep.subr.bf16.mxu0 0
    %393 = vmatpush1.bf16.msra.mxu0 %v383
    %394 = vmatprep.subr.bf16.mxu0 0
    %395 = vmatpush1.bf16.msra.mxu0 %v382
    %396 = vmatprep.subr.bf16.mxu0 0
    %397 = vmatpush1.bf16.msra.mxu0 %v381
    %398 = vmatprep.subr.bf16.mxu0 0
    %399 = vmatpush1.bf16.msra.mxu0 %v380
    %400 = vmatprep.subr.bf16.mxu0 0
    %401 = vmatpush1.bf16.msra.mxu0 %v379
    %402 = vmatprep.subr.bf16.mxu0 0
    %403 = vmatpush1.bf16.msra.mxu0 %v378
    %404 = vmatprep.subr.bf16.mxu0 0
    %405 = vmatpush1.bf16.msra.mxu0 %v377
    %406 = vmatprep.subr.bf16.mxu0 0
    %407 = vmatpush1.bf16.msra.mxu0 %v376
    %408 = vmatprep.subr.bf16.mxu0 0
    %409 = vmatpush2.bf16.msra.mxu0 0
    %410 = vmatprep.subr.bf16.mxu0 0
    %411 = vmatpush2.bf16.msra.mxu0 0
    %412 = vmatprep.subr.bf16.mxu0 0
    %413 = vmatpush2.bf16.msra.mxu0 0
    %414 = vmatprep.subr.bf16.mxu0 0
    %415 = vmatpush2.bf16.msra.mxu0 0
    %416 = vmatprep.subr.bf16.mxu0 0
    %417 = vmatpush2.bf16.msra.mxu0 0
    %418 = vmatprep.subr.bf16.mxu0 0
    %419 = vmatpush2.bf16.msra.mxu0 0
    %420 = vmatprep.subr.bf16.mxu0 0
    %421 = vmatpush2.bf16.msra.mxu0 0
    %422 = vmatprep.subr.bf16.mxu0 0
    %423 = vmatpush2.bf16.msra.mxu0 0
    %424 = vmatprep.mubr.bf16.mxu0 0
    %425 = vmatmul.mubr.bf16.gmra.mxu0 %v320
    %v426 = vpop.f32.mrf.mxu0
    %v427 = vadd.f32 %v342, %v426
    %v428 = vpop.f32.mrf.mxu0
    %v429 = vpop.f32.mrf.mxu0
    %v430 = vadd.f32 %v342, %v429
    %v431 = vpop.f32.mrf.mxu0
    %432 = vdwg.mxu0
    %433 = vmax.xlane.f32.xlu0 %v427
    %v434 = vpop.xlane.xlu0 %433
    %435 = vmax.xlane.f32.xlu0 %v430
    %v436 = vpop.xlane.xlu0 %435
    %v437 = vsub.f32 %v427, %v434
    %v438 = vsub.f32 %v430, %v436
    %v439 = vmul.f32 %v437, 1.442695
    %v440 = vpow.pop %v439
    %v441 = vmul.f32 %v438, 1.442695
    %v442 = vpow.pop %v441
    %443 = vadd.xlane.f32.xlu0 %v440
    %v444 = vpop.xlane.xlu0 %443
    %445 = vadd.xlane.f32.xlu0 %v442
    %v446 = vpop.xlane.xlu0 %445
    %v447 = vlog2.pop %v444
    %v448 = vmul.f32 %v447, 0.6931472
    %v449 = vlog2.pop %v446
    %v450 = vmul.f32 %v449, 0.6931472
    %v451 = vsub.f32 %v437, %v448
    %v452 = vsub.f32 %v438, %v450
    %453 = vst [vmem:[#allocation10] sm:$0xff] %v451
    %454 = vst [vmem:[#allocation10 + $0x8] sm:$0xff] %v452
    // Predicated region
    $region46: #{tpu_custom_call.1} parent=1 // pred_check
      _
    $region47: #{tpu_custom_call.1} parent=1 // pred_check_branch
      %456 = sbr.rel (0) target = $region49
    $region48: #{tpu_custom_call.1} parent=1 // pred_region
      %s458 = ssub.s32 256, 256
      %459 = vsyncadd [#allocation4], %s458
      %s460 = sshll.u32 [#allocation10], 4
      %s461 = int_to_ptr.vmem [resolvable:$true] %s460
      %466 = dma.vmem_to_hbm [thread:$0]  %s461, 256, %s7, [#allocation4], 128, 128, 8
    $region49: #{tpu_custom_call.1} parent=1 // pred_fallthru
      _
    // Predicated region
    $region50: #{tpu_custom_call.1} parent=1 // pred_check
      _
    $region51: #{tpu_custom_call.1} parent=1 // pred_check_branch
      %468 = sbr.rel (0) target = $region53
    $region52: #{tpu_custom_call.1} parent=1 // pred_region
      %469 = dma.done [#allocation4], 256
    $region53: #{tpu_custom_call.1} parent=1 // pred_fallthru
      _
    %470 = vsyncpa [#allocation3], 1
    %471 = vsyncpa [#allocation6], 1
    %472 = vsyncpa [#allocation9], 1
    %473 = vsyncpa [#allocation4], 1

// kernel: tpu_custom_call.1
$region0: #{tpu_custom_call.1}
  #allocation0 [shape = 'u32[]', space=smem, size = 0x4, offset = 0x4, fixed_abs, tag = 'smem constant byte address 0x4 - core index']
  #allocation1 [shape = 'u32[144,128]{1,0:T(1,128)}', space=vmem, size = 0x12000, scoped, tag = 'internal scratch']
  %s0 = inlined_call_operand.hbm [shape: bf16[16,128], index: 0, kind: input, shape index: {}]
  %s1 = inlined_call_operand.hbm [shape: bf16[128,128], index: 1, kind: input, shape index: {}]
  %s2 = inlined_call_operand.vmem [shape: f32[1,128], index: 2, kind: input, shape index: {}]
  %s3 = inlined_call_operand.hbm [shape: bf16[128,128], index: 3, kind: input, shape index: {}]
  %s4 = inlined_call_operand.vmem [shape: f32[1,128], index: 4, kind: input, shape index: {}]
  %s5 = inlined_call_operand.hbm [shape: bf16[128,128], index: 5, kind: input, shape index: {}]
  %s6 = inlined_call_operand.vmem [shape: f32[1,128], index: 6, kind: input, shape index: {}]
  %s7 = inlined_call_operand.hbm [shape: f32[16,128], index: 7, kind: output, shape index: {}]
  %s8 = sld [smem:[#allocation0]]
  $region54: #{tpu_custom_call.1} parent=0
    _
  %s10 = ssub.s32 1, %s8
  %s11 = scalar_select 0, %s10, %s8
  $region1: #{tpu_custom_call.1} parent=0
    #allocation2 [shape = 'u8[4096]{0}', space=vmem, size = 0x1000, scoped, tag = 'input window, operand 0, single buffered']
    #allocation3 [shape = 's32[1]{0}', space=sflag, size = 0x4, scoped, tag = 'scoped memory for tpu_custom_call.1']
    #allocation4 [shape = 's32[1]{0}', space=sflag, size = 0x4, scoped, tag = 'scoped memory for tpu_custom_call.1']
    #allocation5 [shape = 'u8[32768]{0}', space=vmem, size = 0x8000, scoped, tag = 'input window, operand 1, single buffered']
    #allocation6 [shape = 's32[1]{0}', space=sflag, size = 0x4, scoped, tag = 'scoped memory for tpu_custom_call.1']
    #allocation7 [shape = 'u8[32768]{0}', space=vmem, size = 0x8000, scoped, tag = 'input window, operand 3, single buffered']
    #allocation8 [shape = 'u8[32768]{0}', space=vmem, size = 0x8000, scoped, tag = 'input window, operand 5, single buffered']
    #allocation9 [shape = 's32[1]{0}', space=sflag, size = 0x4, scoped, tag = 'scoped memory for tpu_custom_call.1']
    #allocation10 [shape = 'u8[8192]{0}', space=vmem, size = 0x2000, scoped, tag = 'output window, operand 0, single buffered']
    %12 = vsyncpa [#allocation3], 0
    %13 = vsyncpa [#allocation6], 0
    %14 = vsyncpa [#allocation9], 0
    %15 = vsyncpa [#allocation4], 0
    // Predicated region
    $region2: #{tpu_custom_call.1} parent=1 // pred_check
      _
    $region3: #{tpu_custom_call.1} parent=1 // pred_check_branch
      %17 = sbr.rel (0) target = $region5
    $region4: #{tpu_custom_call.1} parent=1 // pred_region
      %s19 = ssub.s32 128, 128
      %20 = vsyncadd [#allocation3], %s19
      %s21 = sshll.u32 [#allocation2], 4
      %s22 = int_to_ptr.vmem [resolvable:$true] %s21
      %27 = dma.hbm_to_vmem [thread:$0]  %s0, 128, %s22, [#allocation3], 64, 64, 4
    $region5: #{tpu_custom_call.1} parent=1 // pred_fallthru
      _
    // Predicated region
    $region6: #{tpu_custom_call.1} parent=1 // pred_check
      _
    $region7: #{tpu_custom_call.1} parent=1 // pred_check_branch
      %29 = sbr.rel (0) target = $region9
    $region8: #{tpu_custom_call.1} parent=1 // pred_region
      %s31 = ssub.s32 1024, 1024
      %32 = vsyncadd [#allocation6], %s31
      %s33 = sshll.u32 [#allocation5], 4
      %s34 = int_to_ptr.vmem [resolvable:$true] %s33
      %39 = dma.hbm_to_vmem [thread:$0]  %s1, 1024, %s34, [#allocation6], 64, 64, 4
    $region9: #{tpu_custom_call.1} parent=1 // pred_fallthru
      _
    // Predicated region
    $region10: #{tpu_custom_call.1} parent=1 // pred_check
      _
    $region11: #{tpu_custom_call.1} parent=1 // pred_check_branch
      %41 = sbr.rel (0) target = $region13
    $region12: #{tpu_custom_call.1} parent=1 // pred_region
      _
    $region13: #{tpu_custom_call.1} parent=1 // pred_fallthru
      _
    // Predicated region
    $region14: #{tpu_custom_call.1} parent=1 // pred_check
      _
    $region15: #{tpu_custom_call.1} parent=1 // pred_check_branch
      %43 = sbr.rel (0) target = $region17
    $region16: #{tpu_custom_call.1} parent=1 // pred_region
      %s45 = ssub.s32 1024, 1024
      %46 = vsyncadd [#allocation6], %s45
      %s47 = sshll.u32 [#allocation7], 4
      %s48 = int_to_ptr.vmem [resolvable:$true] %s47
      %53 = dma.hbm_to_vmem [thread:$0]  %s3, 1024, %s48, [#allocation6], 64, 64, 4
    $region17: #{tpu_custom_call.1} parent=1 // pred_fallthru
      _
    // Predicated region
    $region18: #{tpu_custom_call.1} parent=1 // pred_check
      _
    $region19: #{tpu_custom_call.1} parent=1 // pred_check_branch
      %55 = sbr.rel (0) target = $region21
    $region20: #{tpu_custom_call.1} parent=1 // pred_region
      _
    $region21: #{tpu_custom_call.1} parent=1 // pred_fallthru
      _
    // Predicated region
    $region22: #{tpu_custom_call.1} parent=1 // pred_check
      _
    $region23: #{tpu_custom_call.1} parent=1 // pred_check_branch
      %57 = sbr.rel (0) target = $region25
    $region24: #{tpu_custom_call.1} parent=1 // pred_region
      %s59 = ssub.s32 1024, 1024
      %60 = vsyncadd [#allocation9], %s59
      %s61 = sshll.u32 [#allocation8], 4
      %s62 = int_to_ptr.vmem [resolvable:$true] %s61
      %67 = dma.hbm_to_vmem [thread:$0]  %s5, 1024, %s62, [#allocation9], 64, 64, 4
    $region25: #{tpu_custom_call.1} parent=1 // pred_fallthru
      _
    // Predicated region
    $region26: #{tpu_custom_call.1} parent=1 // pred_check
      _
    $region27: #{tpu_custom_call.1} parent=1 // pred_check_branch
      %69 = sbr.rel (0) target = $region29
    $region28: #{tpu_custom_call.1} parent=1 // pred_region
      _
    $region29: #{tpu_custom_call.1} parent=1 // pred_fallthru
      _
    // Predicated region
    $region30: #{tpu_custom_call.1} parent=1 // pred_check
      _
    $region31: #{tpu_custom_call.1} parent=1 // pred_check_branch
      %71 = sbr.rel (0) target = $region33
    $region32: #{tpu_custom_call.1} parent=1 // pred_region
      %72 = dma.done [#allocation3], 128
    $region33: #{tpu_custom_call.1} parent=1 // pred_fallthru
      _
    // Predicated region
    $region34: #{tpu_custom_call.1} parent=1 // pred_check
      _
    $region35: #{tpu_custom_call.1} parent=1 // pred_check_branch
      %74 = sbr.rel (0) target = $region37
    $region36: #{tpu_custom_call.1} parent=1 // pred_region
      %75 = dma.done [#allocation6], 1024
    $region37: #{tpu_custom_call.1} parent=1 // pred_fallthru
      _
    // Predicated region
    $region38: #{tpu_custom_call.1} parent=1 // pred_check
      _
    $region39: #{tpu_custom_call.1} parent=1 // pred_check_branch
      %77 = sbr.rel (0) target = $region41
    $region40: #{tpu_custom_call.1} parent=1 // pred_region
      %78 = dma.done [#allocation6], 1024
    $region41: #{tpu_custom_call.1} parent=1 // pred_fallthru
      _
    // Predicated region
    $region42: #{tpu_custom_call.1} parent=1 // pred_check
      _
    $region43: #{tpu_custom_call.1} parent=1 // pred_check_branch
      %80 = sbr.rel (0) target = $region45
    $region44: #{tpu_custom_call.1} parent=1 // pred_region
      %81 = dma.done [#allocation9], 1024
    $region45: #{tpu_custom_call.1} parent=1 // pred_fallthru
      _
    %v83 = vld [vmem:[#allocation2] sm:$0xf]
    %v84 = vld [vmem:[#allocation2 + $0x4] sm:$0xf]
    %v85 = vld [vmem:[#allocation5] sm:$0xf]
    %v86 = vld [vmem:[#allocation5 + $0x4] sm:$0xf]
    %v87 = vld [vmem:[#allocation5 + $0x8] sm:$0xf]
    %v88 = vld [vmem:[#allocation5 + $0xc] sm:$0xf]
    %v89 = vld [vmem:[#allocation5 + $0x10] sm:$0xf]
    %v90 = vld [vmem:[#allocation5 + $0x14] sm:$0xf]
    %v91 = vld [vmem:[#allocation5 + $0x18] sm:$0xf]
    %v92 = vld [vmem:[#allocation5 + $0x1c] sm:$0xf]
    %v93 = vld [vmem:[#allocation5 + $0x20] sm:$0xf]
    %v94 = vld [vmem:[#allocation5 + $0x24] sm:$0xf]
    %v95 = vld [vmem:[#allocation5 + $0x28] sm:$0xf]
    %v96 = vld [vmem:[#allocation5 + $0x2c] sm:$0xf]
    %v97 = vld [vmem:[#allocation5 + $0x30] sm:$0xf]
    %v98 = vld [vmem:[#allocation5 + $0x34] sm:$0xf]
    %v99 = vld [vmem:[#allocation5 + $0x38] sm:$0xf]
    %v100 = vld [vmem:[#allocation5 + $0x3c] sm:$0xf]
    %v101 = vld [vmem:[%s2] sm:$0x1]
    %v103 = vlaneseq
    %v104 = vshrl.u32 %v103, 7
    %v105 = vsub.s32 0, %v104
    %v106 = vrot.slane %v101, %v105
    %v110 = vunpack.c.l.b16 %v83
    %v111 = vunpack.c.l.b16 %v84
    %v112 = vpack.c.b16 %v111, %v110
    %v130 = vunpack.c.l.b16 %v85
    %v131 = vunpack.c.l.b16 %v86
    %v132 = vunpack.c.l.b16 %v87
    %v133 = vunpack.c.l.b16 %v88
    %v134 = vunpack.c.l.b16 %v89
    %v135 = vunpack.c.l.b16 %v90
    %v136 = vunpack.c.l.b16 %v91
    %v137 = vunpack.c.l.b16 %v92
    %v138 = vunpack.c.l.b16 %v93
    %v139 = vunpack.c.l.b16 %v94
    %v140 = vunpack.c.l.b16 %v95
    %v141 = vunpack.c.l.b16 %v96
    %v142 = vunpack.c.l.b16 %v97
    %v143 = vunpack.c.l.b16 %v98
    %v144 = vunpack.c.l.b16 %v99
    %v145 = vunpack.c.l.b16 %v100
    %v146 = vpack.c.b16 %v131, %v130
    %v147 = vpack.c.b16 %v133, %v132
    %v148 = vpack.c.b16 %v135, %v134
    %v149 = vpack.c.b16 %v137, %v136
    %v150 = vpack.c.b16 %v139, %v138
    %v151 = vpack.c.b16 %v141, %v140
    %v152 = vpack.c.b16 %v143, %v142
    %v153 = vpack.c.b16 %v145, %v144
    %162 = vmatprep.subr.bf16.mxu0 0
    %163 = vmatpush1.bf16.msra.mxu0 %v153
    %164 = vmatprep.subr.bf16.mxu0 0
    %165 = vmatpush1.bf16.msra.mxu0 %v152
    %166 = vmatprep.subr.bf16.mxu0 0
    %167 = vmatpush1.bf16.msra.mxu0 %v151
    %168 = vmatprep.subr.bf16.mxu0 0
    %169 = vmatpush1.bf16.msra.mxu0 %v150
    %170 = vmatprep.subr.bf16.mxu0 0
    %171 = vmatpush1.bf16.msra.mxu0 %v149
    %172 = vmatprep.subr.bf16.mxu0 0
    %173 = vmatpush1.bf16.msra.mxu0 %v148
    %174 = vmatprep.subr.bf16.mxu0 0
    %175 = vmatpush1.bf16.msra.mxu0 %v147
    %176 = vmatprep.subr.bf16.mxu0 0
    %177 = vmatpush1.bf16.msra.mxu0 %v146
    %178 = vmatprep.subr.bf16.mxu0 0
    %179 = vmatpush2.bf16.msra.mxu0 0
    %180 = vmatprep.subr.bf16.mxu0 0
    %181 = vmatpush2.bf16.msra.mxu0 0
    %182 = vmatprep.subr.bf16.mxu0 0
    %183 = vmatpush2.bf16.msra.mxu0 0
    %184 = vmatprep.subr.bf16.mxu0 0
    %185 = vmatpush2.bf16.msra.mxu0 0
    %186 = vmatprep.subr.bf16.mxu0 0
    %187 = vmatpush2.bf16.msra.mxu0 0
    %188 = vmatprep.subr.bf16.mxu0 0
    %189 = vmatpush2.bf16.msra.mxu0 0
    %190 = vmatprep.subr.bf16.mxu0 0
    %191 = vmatpush2.bf16.msra.mxu0 0
    %192 = vmatprep.subr.bf16.mxu0 0
    %193 = vmatpush2.bf16.msra.mxu0 0
    %194 = vmatprep.mubr.bf16.mxu0 0
    %195 = vmatmul.mubr.bf16.gmra.mxu0 %v112
    %v196 = vpop.f32.mrf.mxu0
    %v197 = vadd.f32 %v106, %v196
    %v198 = vpop.f32.mrf.mxu0
    %v199 = vpop.f32.mrf.mxu0
    %v200 = vadd.f32 %v106, %v199
    %v201 = vpop.f32.mrf.mxu0
    %202 = vdwg.mxu0
    %v203 = vmax.f32 %v197, 0.0
    %v204 = vmax.f32 %v200, 0.0
    %v205 = vpack.c.bf16 %v204, %v203
    %v206 = vld [vmem:[#allocation7] sm:$0xf]
    %v207 = vld [vmem:[#allocation7 + $0x4] sm:$0xf]
    %v208 = vld [vmem:[#allocation7 + $0x8] sm:$0xf]
    %v209 = vld [vmem:[#allocation7 + $0xc] sm:$0xf]
    %v210 = vld [vmem:[#allocation7 + $0x10] sm:$0xf]
    %v211 = vld [vmem:[#allocation7 + $0x14] sm:$0xf]
    %v212 = vld [vmem:[#allocation7 + $0x18] sm:$0xf]
    %v213 = vld [vmem:[#allocation7 + $0x1c] sm:$0xf]
    %v214 = vld [vmem:[#allocation7 + $0x20] sm:$0xf]
    %v215 = vld [vmem:[#allocation7 + $0x24] sm:$0xf]
    %v216 = vld [vmem:[#allocation7 + $0x28] sm:$0xf]
    %v217 = vld [vmem:[#allocation7 + $0x2c] sm:$0xf]
    %v218 = vld [vmem:[#allocation7 + $0x30] sm:$0xf]
    %v219 = vld [vmem:[#allocation7 + $0x34] sm:$0xf]
    %v220 = vld [vmem:[#allocation7 + $0x38] sm:$0xf]
    %v221 = vld [vmem:[#allocation7 + $0x3c] sm:$0xf]
    %v222 = vld [vmem:[%s4] sm:$0x1]
    %v224 = vlaneseq
    %v225 = vshrl.u32 %v224, 7
    %v226 = vsub.s32 0, %v225
    %v227 = vrot.slane %v222, %v226
    %v245 = vunpack.c.l.b16 %v206
    %v246 = vunpack.c.l.b16 %v207
    %v247 = vunpack.c.l.b16 %v208
    %v248 = vunpack.c.l.b16 %v209
    %v249 = vunpack.c.l.b16 %v210
    %v250 = vunpack.c.l.b16 %v211
    %v251 = vunpack.c.l.b16 %v212
    %v252 = vunpack.c.l.b16 %v213
    %v253 = vunpack.c.l.b16 %v214
    %v254 = vunpack.c.l.b16 %v215
    %v255 = vunpack.c.l.b16 %v216
    %v256 = vunpack.c.l.b16 %v217
    %v257 = vunpack.c.l.b16 %v218
    %v258 = vunpack.c.l.b16 %v219
    %v259 = vunpack.c.l.b16 %v220
    %v260 = vunpack.c.l.b16 %v221
    %v261 = vpack.c.b16 %v246, %v245
    %v262 = vpack.c.b16 %v248, %v247
    %v263 = vpack.c.b16 %v250, %v249
    %v264 = vpack.c.b16 %v252, %v251
    %v265 = vpack.c.b16 %v254, %v253
    %v266 = vpack.c.b16 %v256, %v255
    %v267 = vpack.c.b16 %v258, %v257
    %v268 = vpack.c.b16 %v260, %v259
    %277 = vmatprep.subr.bf16.mxu0 0
    %278 = vmatpush1.bf16.msra.mxu0 %v268
    %279 = vmatprep.subr.bf16.mxu0 0
    %280 = vmatpush1.bf16.msra.mxu0 %v267
    %281 = vmatprep.subr.bf16.mxu0 0
    %282 = vmatpush1.bf16.msra.mxu0 %v266
    %283 = vmatprep.subr.bf16.mxu0 0
    %284 = vmatpush1.bf16.msra.mxu0 %v265
    %285 = vmatprep.subr.bf16.mxu0 0
    %286 = vmatpush1.bf16.msra.mxu0 %v264
    %287 = vmatprep.subr.bf16.mxu0 0
    %288 = vmatpush1.bf16.msra.mxu0 %v263
    %289 = vmatprep.subr.bf16.mxu0 0
    %290 = vmatpush1.bf16.msra.mxu0 %v262
    %291 = vmatprep.subr.bf16.mxu0 0
    %292 = vmatpush1.bf16.msra.mxu0 %v261
    %293 = vmatprep.subr.bf16.mxu0 0
    %294 = vmatpush2.bf16.msra.mxu0 0
    %295 = vmatprep.subr.bf16.mxu0 0
    %296 = vmatpush2.bf16.msra.mxu0 0
    %297 = vmatprep.subr.bf16.mxu0 0
    %298 = vmatpush2.bf16.msra.mxu0 0
    %299 = vmatprep.subr.bf16.mxu0 0
    %300 = vmatpush2.bf16.msra.mxu0 0
    %301 = vmatprep.subr.bf16.mxu0 0
    %302 = vmatpush2.bf16.msra.mxu0 0
    %303 = vmatprep.subr.bf16.mxu0 0
    %304 = vmatpush2.bf16.msra.mxu0 0
    %305 = vmatprep.subr.bf16.mxu0 0
    %306 = vmatpush2.bf16.msra.mxu0 0
    %307 = vmatprep.subr.bf16.mxu0 0
    %308 = vmatpush2.bf16.msra.mxu0 0
    %309 = vmatprep.mubr.bf16.mxu0 0
    %310 = vmatmul.mubr.bf16.gmra.mxu0 %v205
    %v311 = vpop.f32.mrf.mxu0
    %v312 = vadd.f32 %v227, %v311
    %v313 = vpop.f32.mrf.mxu0
    %v314 = vpop.f32.mrf.mxu0
    %v315 = vadd.f32 %v227, %v314
    %v316 = vpop.f32.mrf.mxu0
    %317 = vdwg.mxu0
    %v318 = vmax.f32 %v312, 0.0
    %v319 = vmax.f32 %v315, 0.0
    %v320 = vpack.c.bf16 %v319, %v318
    %v321 = vld [vmem:[#allocation8] sm:$0xf]
    %v322 = vld [vmem:[#allocation8 + $0x4] sm:$0xf]
    %v323 = vld [vmem:[#allocation8 + $0x8] sm:$0xf]
    %v324 = vld [vmem:[#allocation8 + $0xc] sm:$0xf]
    %v325 = vld [vmem:[#allocation8 + $0x10] sm:$0xf]
    %v326 = vld [vmem:[#allocation8 + $0x14] sm:$0xf]
    %v327 = vld [vmem:[#allocation8 + $0x18] sm:$0xf]
    %v328 = vld [vmem:[#allocation8 + $0x1c] sm:$0xf]
    %v329 = vld [vmem:[#allocation8 + $0x20] sm:$0xf]
    %v330 = vld [vmem:[#allocation8 + $0x24] sm:$0xf]
    %v331 = vld [vmem:[#allocation8 + $0x28] sm:$0xf]
    %v332 = vld [vmem:[#allocation8 + $0x2c] sm:$0xf]
    %v333 = vld [vmem:[#allocation8 + $0x30] sm:$0xf]
    %v334 = vld [vmem:[#allocation8 + $0x34] sm:$0xf]
    %v335 = vld [vmem:[#allocation8 + $0x38] sm:$0xf]
    %v336 = vld [vmem:[#allocation8 + $0x3c] sm:$0xf]
    %v337 = vld [vmem:[%s6] sm:$0x1]
    %v339 = vlaneseq
    %v340 = vshrl.u32 %v339, 7
    %v341 = vsub.s32 0, %v340
    %v342 = vrot.slane %v337, %v341
    %v360 = vunpack.c.l.b16 %v321
    %v361 = vunpack.c.l.b16 %v322
    %v362 = vunpack.c.l.b16 %v323
    %v363 = vunpack.c.l.b16 %v324
    %v364 = vunpack.c.l.b16 %v325
    %v365 = vunpack.c.l.b16 %v326
    %v366 = vunpack.c.l.b16 %v327
    %v367 = vunpack.c.l.b16 %v328
    %v368 = vunpack.c.l.b16 %v329
    %v369 = vunpack.c.l.b16 %v330
    %v370 = vunpack.c.l.b16 %v331
    %v371 = vunpack.c.l.b16 %v332
    %v372 = vunpack.c.l.b16 %v333
    %v373 = vunpack.c.l.b16 %v334
    %v374 = vunpack.c.l.b16 %v335
    %v375 = vunpack.c.l.b16 %v336
    %v376 = vpack.c.b16 %v361, %v360
    %v377 = vpack.c.b16 %v363, %v362
    %v378 = vpack.c.b16 %v365, %v364
    %v379 = vpack.c.b16 %v367, %v366
    %v380 = vpack.c.b16 %v369, %v368
    %v381 = vpack.c.b16 %v371, %v370
    %v382 = vpack.c.b16 %v373, %v372
    %v383 = vpack.c.b16 %v375, %v374
    %392 = vmatprep.subr.bf16.mxu0 0
    %393 = vmatpush1.bf16.msra.mxu0 %v383
    %394 = vmatprep.subr.bf16.mxu0 0
    %395 = vmatpush1.bf16.msra.mxu0 %v382
    %396 = vmatprep.subr.bf16.mxu0 0
    %397 = vmatpush1.bf16.msra.mxu0 %v381
    %398 = vmatprep.subr.bf16.mxu0 0
    %399 = vmatpush1.bf16.msra.mxu0 %v380
    %400 = vmatprep.subr.bf16.mxu0 0
    %401 = vmatpush1.bf16.msra.mxu0 %v379
    %402 = vmatprep.subr.bf16.mxu0 0
    %403 = vmatpush1.bf16.msra.mxu0 %v378
    %404 = vmatprep.subr.bf16.mxu0 0
    %405 = vmatpush1.bf16.msra.mxu0 %v377
    %406 = vmatprep.subr.bf16.mxu0 0
    %407 = vmatpush1.bf16.msra.mxu0 %v376
    %408 = vmatprep.subr.bf16.mxu0 0
    %409 = vmatpush2.bf16.msra.mxu0 0
    %410 = vmatprep.subr.bf16.mxu0 0
    %411 = vmatpush2.bf16.msra.mxu0 0
    %412 = vmatprep.subr.bf16.mxu0 0
    %413 = vmatpush2.bf16.msra.mxu0 0
    %414 = vmatprep.subr.bf16.mxu0 0
    %415 = vmatpush2.bf16.msra.mxu0 0
    %416 = vmatprep.subr.bf16.mxu0 0
    %417 = vmatpush2.bf16.msra.mxu0 0
    %418 = vmatprep.subr.bf16.mxu0 0
    %419 = vmatpush2.bf16.msra.mxu0 0
    %420 = vmatprep.subr.bf16.mxu0 0
    %421 = vmatpush2.bf16.msra.mxu0 0
    %422 = vmatprep.subr.bf16.mxu0 0
    %423 = vmatpush2.bf16.msra.mxu0 0
    %424 = vmatprep.mubr.bf16.mxu0 0
    %425 = vmatmul.mubr.bf16.gmra.mxu0 %v320
    %v426 = vpop.f32.mrf.mxu0
    %v427 = vadd.f32 %v342, %v426
    %v428 = vpop.f32.mrf.mxu0
    %v429 = vpop.f32.mrf.mxu0
    %v430 = vadd.f32 %v342, %v429
    %v431 = vpop.f32.mrf.mxu0
    %432 = vdwg.mxu0
    %433 = vmax.xlane.f32.xlu0 %v427
    %v434 = vpop.xlane.xlu0 %433
    %435 = vmax.xlane.f32.xlu0 %v430
    %v436 = vpop.xlane.xlu0 %435
    %v437 = vsub.f32 %v427, %v434
    %v438 = vsub.f32 %v430, %v436
    %v439 = vmul.f32 %v437, 1.442695
    %v440 = vpow.pop %v439
    %v441 = vmul.f32 %v438, 1.442695
    %v442 = vpow.pop %v441
    %443 = vadd.xlane.f32.xlu0 %v440
    %v444 = vpop.xlane.xlu0 %443
    %445 = vadd.xlane.f32.xlu0 %v442
    %v446 = vpop.xlane.xlu0 %445
    %v447 = vlog2.pop %v444
    %v448 = vmul.f32 %v447, 0.6931472
    %v449 = vlog2.pop %v446
    %v450 = vmul.f32 %v449, 0.6931472
    %v451 = vsub.f32 %v437, %v448
    %v452 = vsub.f32 %v438, %v450
    %453 = vst [vmem:[#allocation10] sm:$0xff] %v451
    %454 = vst [vmem:[#allocation10 + $0x8] sm:$0xff] %v452
    // Predicated region
    $region46: #{tpu_custom_call.1} parent=1 // pred_check
      _
    $region47: #{tpu_custom_call.1} parent=1 // pred_check_branch
      %456 = sbr.rel (0) target = $region49
    $region48: #{tpu_custom_call.1} parent=1 // pred_region
      %s458 = ssub.s32 256, 256
      %459 = vsyncadd [#allocation4], %s458
      %s460 = sshll.u32 [#allocation10], 4
      %s461 = int_to_ptr.vmem [resolvable:$true] %s460
      %466 = dma.vmem_to_hbm [thread:$0]  %s461, 256, %s7, [#allocation4], 128, 128, 8
    $region49: #{tpu_custom_call.1} parent=1 // pred_fallthru
      _
    // Predicated region
    $region50: #{tpu_custom_call.1} parent=1 // pred_check
      _
    $region51: #{tpu_custom_call.1} parent=1 // pred_check_branch
      %468 = sbr.rel (0) target = $region53
    $region52: #{tpu_custom_call.1} parent=1 // pred_region
      %469 = dma.done [#allocation4], 256
    $region53: #{tpu_custom_call.1} parent=1 // pred_fallthru
      _
    %470 = vsyncpa [#allocation3], 1
    %471 = vsyncpa [#allocation6], 1
    %472 = vsyncpa [#allocation9], 1
    %473 = vsyncpa [#allocation4], 1

</llo_original>
